<compile_context>
chip_gen: v6e
topology: v6e:2x2x1
jax: 0.10.0
libtpu: 0.0.40
codegen_flags: <defaults>
</compile_context>

<pallas_src>
import functools

import jax
import jax.numpy as jnp
from jax import lax
from jax.experimental import pallas as pl
from jax.experimental.pallas import tpu as pltpu


def _gather_kernel(x_ref, o_ref, *, inputs, contiguous_start):
    # Static column selection: every index in `inputs` is a compile-time
    # constant, so this lowers to static lane slices + one lane concat
    # (VPU/XLU only; no MXU, no mask operand).
    x = x_ref[...]
    n = len(inputs)
    if contiguous_start is not None:
        # Indices are a contiguous ascending range -> single static slice.
        o_ref[...] = lax.slice_in_dim(
            x, contiguous_start, contiguous_start + n, axis=1
        )
    else:
        cols = [lax.slice_in_dim(x, si, si + 1, axis=1) for si in inputs]
        o_ref[...] = jnp.concatenate(cols, axis=1)


def _sublane_multiple(dtype) -> int:
    # Native sublane packing: 8 rows for 4-byte dtypes, 16 for 2-byte,
    # 32 for 1-byte.
    itemsize = jnp.dtype(dtype).itemsize
    return max(8, 8 * (4 // max(1, itemsize)))


@functools.partial(jax.jit, static_argnames=("inputs",))
def _mask_select(x2d: jax.Array, *, inputs: tuple[int, ...]) -> jax.Array:
    """x2d: (M, K) -> (M, len(inputs)) by static column gather."""
    M, K = x2d.shape
    N = len(inputs)
    itemsize = jnp.dtype(x2d.dtype).itemsize
    mult = _sublane_multiple(x2d.dtype)

    # Row-tile size: as large as possible for streaming efficiency, but cap a
    # single input block at ~4 MiB so double-buffering (2x) stays comfortably
    # inside the default scoped-VMEM limit even for wide K.
    budget_bytes = 4 * 1024 * 1024
    tm_cap = max(mult, (budget_bytes // max(1, K * itemsize)) // mult * mult)
    TM = min(4096, tm_cap)
    # Never use a tile taller than the (sublane-rounded) array itself.
    m_rounded = ((M + mult - 1) // mult) * mult
    TM = max(mult, min(TM, m_rounded))

    grid_m = pl.cdiv(M, TM)  # ragged last block handled by masked stores

    # Fast path when the selected columns are a contiguous ascending range.
    contiguous_start = None
    if N > 0 and inputs == tuple(range(inputs[0], inputs[0] + N)):
        contiguous_start = inputs[0]

    kernel = functools.partial(
        _gather_kernel, inputs=inputs, contiguous_start=contiguous_start
    )

    return pl.pallas_call(
        kernel,
        out_shape=jax.ShapeDtypeStruct((M, N), x2d.dtype),
        grid_spec=pltpu.PrefetchScalarGridSpec(
            num_scalar_prefetch=0,
            grid=(grid_m,),
            # K and N blocks span the full arrays (full-extent exception to
            # the (8,128) rule); TM is a multiple of the dtype sublane pack.
            in_specs=[pl.BlockSpec((TM, K), lambda i: (i, 0))],
            out_specs=pl.BlockSpec((TM, N), lambda i: (i, 0)),
        ),
        compiler_params=pltpu.CompilerParams(
            # Independent M tiles; lets v7x shard across its 2 TensorCores,
            # harmless on v5e/v6e.
            dimension_semantics=("parallel",),
        ),
    )(x2d)


class MaskPallas:
    """JAX/Pallas port of the PyTorch Mask module (static column selection)."""

    def __init__(self, tot_num: int, inputs: list[int]) -> None:
        in_dim = tot_num
        out_dim = len(inputs)
        assert out_dim <= in_dim, "incompatible mask dimensions"
        self.tot_num = in_dim
        # Store indices statically; no one-hot mask matrix is materialized
        # (x @ one_hot_mask is mathematically identical to this column gather).
        self.inputs: tuple[int, ...] | None = (
            None if out_dim == 0 else tuple(int(i) for i in inputs)
        )

    def __call__(self, x: jax.Array) -> jax.Array:
        if self.inputs is None:
            return x
        *lead, K = x.shape
        assert K == self.tot_num
        x2d = x.reshape((-1, K))
        y2d = _mask_select(x2d, inputs=self.inputs)
        return y2d.reshape((*lead, len(self.inputs)))


if __name__ == "__main__":
    key = jax.random.PRNGKey(0)

    tot_num = 32
    inputs = [3, 7, 1, 30]          # select 4 of 32 features
    batch, seq = 2, 8

    x = jax.random.normal(key, (batch, seq, tot_num), dtype=jnp.float32)

    mod = MaskPallas(tot_num, inputs)
    y = jax.block_until_ready(mod(x))

    # Reference: x @ one_hot_mask == column gather.
    idx = jnp.asarray(inputs, dtype=jnp.int32)
    ref = x[..., idx]
    assert y.shape == (batch, seq, len(inputs))
    assert jnp.allclose(y, ref, atol=0.0), "mismatch vs reference"

    # Empty-inputs (identity) branch.
    mod_empty = MaskPallas(tot_num, [])
    y_id = jax.block_until_ready(mod_empty(x))
    assert jnp.array_equal(y_id, x)

    # Tiled / ragged path (M not a multiple of the tile, larger M).
    x_big = jax.random.normal(key, (9001, tot_num), dtype=jnp.float32)
    y_big = jax.block_until_ready(mod(x_big))
    assert jnp.allclose(y_big, x_big[:, idx], atol=0.0)

    # Contiguous-range fast path.
    mod_range = MaskPallas(tot_num, [4, 5, 6, 7])
    y_rng = jax.block_until_ready(mod_range(x))
    assert jnp.allclose(y_rng, x[..., 4:8], atol=0.0)

    print("KERNEL_OK")
</pallas_src>

<mosaic_0001>
module attributes {stable_mosaic.version = 11 : i64} {
  func.func @_gather_kernel(%arg0: i32, %arg1: memref<16x32xf32, #tpu.memory_space<vmem>>, %arg2: memref<16x4xf32, #tpu.memory_space<vmem>>) attributes {dimension_semantics = [#tpu.dimension_semantics<parallel>], iteration_bounds = array<i64: 1>, scalar_prefetch = 0 : i64, scratch_operands = 0 : i64, tpu.core_type = #tpu.core_type<tc>, window_params = [{transform_indices = @transform_0, window_bounds = array<i64: 16, 32>}, {transform_indices = @transform_1, window_bounds = array<i64: 16, 4>}]} {
    %c0 = arith.constant 0 : index
    %c0_0 = arith.constant 0 : index
    %0 = vector.load %arg1[%c0, %c0_0] : memref<16x32xf32, #tpu.memory_space<vmem>>, vector<16x32xf32>
    %1 = vector.extract_strided_slice %0 {offsets = [0, 3], sizes = [16, 1], strides = [1, 1]} : vector<16x32xf32> to vector<16x1xf32>
    %2 = vector.extract_strided_slice %0 {offsets = [0, 7], sizes = [16, 1], strides = [1, 1]} : vector<16x32xf32> to vector<16x1xf32>
    %3 = vector.extract_strided_slice %0 {offsets = [0, 1], sizes = [16, 1], strides = [1, 1]} : vector<16x32xf32> to vector<16x1xf32>
    %4 = vector.extract_strided_slice %0 {offsets = [0, 30], sizes = [16, 1], strides = [1, 1]} : vector<16x32xf32> to vector<16x1xf32>
    %5 = tpu.concatenate %1, %2, %3, %4 in 1 : vector<16x1xf32>, vector<16x1xf32>, vector<16x1xf32>, vector<16x1xf32> -> vector<16x4xf32>
    %c0_1 = arith.constant 0 : index
    %c0_2 = arith.constant 0 : index
    %6 = vector.load %arg2[%c0_1, %c0_2] : memref<16x4xf32, #tpu.memory_space<vmem>>, vector<16x4xf32>
    tpu.vector_store %arg2[%c0_1, %c0_2], %5 {strides = array<i32>} : memref<16x4xf32, #tpu.memory_space<vmem>>, vector<16x4xf32>,
    return
  }
  func.func @transform_0(%arg0: i32) -> (i32, i32) {
    %c0_i32 = arith.constant 0 : i32
    %c0_i32_0 = arith.constant 0 : i32
    return %arg0, %c0_i32 : i32, i32
  }
  func.func @transform_1(%arg0: i32) -> (i32, i32) {
    %c0_i32 = arith.constant 0 : i32
    %c0_i32_0 = arith.constant 0 : i32
    return %arg0, %c0_i32 : i32, i32
  }
}

</mosaic_0001>

<llo_original>
// kernel: _mask_select.1
$region0: #{_mask_select.1}
  #allocation0 [shape = 'u32[]', space=smem, size = 0x4, offset = 0x4, fixed_abs, tag = 'smem constant byte address 0x4 - core index']
  #allocation1 [shape = 'u32[144,128]{1,0:T(1,128)}', space=vmem, size = 0x12000, scoped, tag = 'internal scratch']
  %s0 = inlined_call_operand.hbm [shape: f32[16,32], index: 0, kind: input, shape index: {}]
  %s1 = inlined_call_operand.vmem [shape: f32[16,4], index: 1, kind: output, shape index: {}]
  %s2 = sld [smem:[#allocation0]]
  $region18: #{_mask_select.1} parent=0
    _
  %s4 = ssub.s32 1, %s2
  %s5 = scalar_select 0, %s4, %s2
  $region1: #{_mask_select.1} parent=0
    #allocation2 [shape = 'u8[8192]{0}', space=vmem, size = 0x2000, scoped, tag = 'input window, operand 0, single buffered']
    #allocation3 [shape = 's32[1]{0}', space=sflag, size = 0x4, scoped, tag = 'scoped memory for _mask_select.1']
    %6 = vsyncpa [#allocation3], 0
    // Predicated region
    $region2: #{_mask_select.1} parent=1 // pred_check
      _
    $region3: #{_mask_select.1} parent=1 // pred_check_branch
      %8 = sbr.rel (0) target = $region5
    $region4: #{_mask_select.1} parent=1 // pred_region
      %s10 = ssub.s32 256, 256
      %11 = vsyncadd [#allocation3], %s10
      %s12 = sshll.u32 [#allocation2], 4
      %s13 = int_to_ptr.vmem [resolvable:$true] %s12
      %18 = dma.hbm_to_vmem [thread:$0]  %s0, 256, %s13, [#allocation3], 128, 128, 8
    $region5: #{_mask_select.1} parent=1 // pred_fallthru
      _
    // Predicated region
    $region6: #{_mask_select.1} parent=1 // pred_check
      _
    $region7: #{_mask_select.1} parent=1 // pred_check_branch
      %20 = sbr.rel (0) target = $region9
    $region8: #{_mask_select.1} parent=1 // pred_region
      %21 = dma.done [#allocation3], 256
    $region9: #{_mask_select.1} parent=1 // pred_fallthru
      _
    %v22 = vld [vmem:[#allocation2] sm:$0xff]
    %v23 = vld [vmem:[#allocation2 + $0x8] sm:$0xff]
    %26 = vrot.lane.b32.xlu0 %v22, 125
    %v27 = vpop.permute.xlu0 %26
    %28 = vrot.lane.b32.xlu0 %v23, 125
    %v29 = vpop.permute.xlu0 %28
    %32 = vrot.lane.b32.xlu0 %v22, 122
    %v33 = vpop.permute.xlu0 %32
    %34 = vrot.lane.b32.xlu0 %v23, 122
    %v35 = vpop.permute.xlu0 %34
    %38 = vrot.lane.b32.xlu0 %v22, 1
    %v39 = vpop.permute.xlu0 %38
    %40 = vrot.lane.b32.xlu0 %v23, 1
    %v41 = vpop.permute.xlu0 %40
    %44 = vrot.lane.b32.xlu0 %v22, 101
    %v45 = vpop.permute.xlu0 %44
    %46 = vrot.lane.b32.xlu0 %v23, 101
    %v47 = vpop.permute.xlu0 %46
    %vm50 = vcmask 7168
    %v51 = vsel %vm50, %v27, %v33
    %v52 = vsel %vm50, %v29, %v35
    %vm53 = vcmask 15360
    %v54 = vsel %vm53, %v51, %v39
    %v55 = vsel %vm53, %v52, %v41
    %vm56 = vcmask 23552
    %v57 = vsel %vm56, %v54, %v45
    %v58 = vsel %vm56, %v55, %v47
    %vm59 = vcmask 31744
    %60 = vst.msk [vmem:[%s1] sm:$0xff] %vm59, %v57
    %61 = vst.msk [vmem:[%s1 + $0x8] sm:$0xff] %vm59, %v58
    // Predicated region
    $region10: #{_mask_select.1} parent=1 // pred_check
      _
    $region11: #{_mask_select.1} parent=1 // pred_check_branch
      %63 = sbr.rel (0) target = $region13
    $region12: #{_mask_select.1} parent=1 // pred_region
      _
    $region13: #{_mask_select.1} parent=1 // pred_fallthru
      _
    // Predicated region
    $region14: #{_mask_select.1} parent=1 // pred_check
      _
    $region15: #{_mask_select.1} parent=1 // pred_check_branch
      %65 = sbr.rel (0) target = $region17
    $region16: #{_mask_select.1} parent=1 // pred_region
      _
    $region17: #{_mask_select.1} parent=1 // pred_fallthru
      _
    %66 = vsyncpa [#allocation3], 1

</llo_original>
